<compile_context>
chip_gen: v5e
topology: v5e:2x2
jax: 0.10.0
libtpu: 0.0.40
codegen_flags: <defaults>
</compile_context>

<pallas_src>
import functools
import math

import jax
import jax.numpy as jnp
from jax.experimental import pallas as pl
from jax.experimental.pallas import tpu as pltpu

LN_EPS = 1e-5


def _vmem_limit_bytes():
    """Per-generation scoped-VMEM limit: ~112 MiB on v5e/v6e (128 MiB VMEM),
    ~48 MiB on v7x (64 MiB VMEM), previously-validated 64 MiB fallback."""
    try:
        cap = int(getattr(pltpu.get_tpu_info(), "vmem_capacity_bytes", 0))
    except Exception:
        cap = 0
    if cap <= 0:
        return 64 * 1024 * 1024
    return int(min(max(cap - 16 * 1024 * 1024, 32 * 1024 * 1024), 112 * 1024 * 1024))


VMEM_LIMIT = _vmem_limit_bytes()


def _pick_tile(n, cap, mult):
    """Largest divisor of n that is a multiple of `mult` and <= cap (else n).
    TODO(synk): non-divisible dims should be padded / masked instead of
    falling back to a single full-size block."""
    if n <= cap:
        return n
    t = (cap // mult) * mult
    while t >= mult:
        if n % t == 0:
            return t
        t -= mult
    return n


def _cparams(*sem):
    return pltpu.CompilerParams(dimension_semantics=sem,
                                vmem_limit_bytes=VMEM_LIMIT)


# ----------------------------------------------------------------------------
# Pallas kernels
# ----------------------------------------------------------------------------

def _layernorm_kernel(x_ref, g_ref, b_ref, o_ref):
    x = x_ref[...].astype(jnp.float32)
    mu = jnp.mean(x, axis=-1, keepdims=True)
    var = jnp.mean(jnp.square(x - mu), axis=-1, keepdims=True)
    y = (x - mu) * jax.lax.rsqrt(var + LN_EPS)
    o_ref[...] = (y * g_ref[...] + b_ref[...]).astype(o_ref.dtype)


def _matmul_kernel(x_ref, w_ref, o_ref):
    # bf16 MXU inputs, fp32 accumulate; no bias (attention_bias=False).
    # Weight block has a constant index -> DMA'd once, fully resident.
    x = x_ref[...].astype(jnp.bfloat16)
    o_ref[...] = jnp.dot(x, w_ref[...],
                         preferred_element_type=jnp.float32).astype(o_ref.dtype)


def _ln_matmul_kernel(x_ref, g_ref, b_ref, w_ref, o_ref):
    # LayerNorm fused into the projection; no N grid axis, so the LN of the
    # (tm, K) block is computed exactly once per row tile.
    x = x_ref[...].astype(jnp.float32)
    mu = jnp.mean(x, axis=-1, keepdims=True)
    var = jnp.mean(jnp.square(x - mu), axis=-1, keepdims=True)
    y = ((x - mu) * jax.lax.rsqrt(var + LN_EPS) * g_ref[...]
         + b_ref[...]).astype(jnp.bfloat16)
    o_ref[...] = jnp.dot(y, w_ref[...],
                         preferred_element_type=jnp.float32).astype(o_ref.dtype)


def _out_proj_residual_kernel(x_ref, w_ref, b_ref, res_ref, o_ref, *, scale):
    # attention out-projection + bias, scaled, + residual add, all fused.
    x = x_ref[...].astype(jnp.bfloat16)
    y = jnp.dot(x, w_ref[...], preferred_element_type=jnp.float32) + b_ref[...]
    o_ref[...] = (scale * y + res_ref[...].astype(jnp.float32)).astype(o_ref.dtype)


def _ln_geglu_ff_kernel(x_ref, g_ref, b_ref, wh_ref, bh_ref, wg_ref, bg_ref,
                        w2_ref, b2_ref, o_ref, y_sc, acc_sc):
    # norm3 + GEGLU + output Linear + residual; the DF (=4*dim) axis is a
    # reduction grid axis so the FF weights are streamed tile-by-tile and the
    # second dot accumulates into an f32 VMEM scratch.
    j = pl.program_id(1)

    @pl.when(j == 0)
    def _():
        x = x_ref[...].astype(jnp.float32)
        mu = jnp.mean(x, axis=-1, keepdims=True)
        var = jnp.mean(jnp.square(x - mu), axis=-1, keepdims=True)
        y_sc[...] = ((x - mu) * jax.lax.rsqrt(var + LN_EPS) * g_ref[...]
                     + b_ref[...]).astype(jnp.bfloat16)
        acc_sc[...] = jnp.zeros(acc_sc.shape, jnp.float32)

    y = y_sc[...]
    hid = jnp.dot(y, wh_ref[...], preferred_element_type=jnp.float32) + bh_ref[...]
    gate = jnp.dot(y, wg_ref[...], preferred_element_type=jnp.float32) + bg_ref[...]
    act = (hid * jax.nn.gelu(gate, approximate=False)).astype(jnp.bfloat16)
    acc_sc[...] += jnp.dot(act, w2_ref[...], preferred_element_type=jnp.float32)

    @pl.when(j == pl.num_programs(1) - 1)
    def _():
        out = acc_sc[...] + b2_ref[...] + x_ref[...].astype(jnp.float32)
        o_ref[...] = out.astype(o_ref.dtype)       # residual = unnormalized input


def _flash_attn_kernel(q_ref, k_ref, v_ref, o_ref, m_sc, l_sc, acc_sc):
    # Online-softmax flash attention; 1/sqrt(dh) already folded into the
    # q-projection weights, and q/k/v arrive as bf16 (no casts in the loop).
    kv = pl.program_id(3)

    @pl.when(kv == 0)
    def _():
        m_sc[...] = jnp.full(m_sc.shape, -jnp.inf, jnp.float32)
        l_sc[...] = jnp.zeros(l_sc.shape, jnp.float32)
        acc_sc[...] = jnp.zeros(acc_sc.shape, jnp.float32)

    q = q_ref[0, 0]                                   # (tq, dh) bf16, pre-scaled
    k = k_ref[0, 0]                                   # (tk, dh) bf16
    s = jax.lax.dot_general(q, k, (((1,), (1,)), ((), ())),
                            preferred_element_type=jnp.float32)      # (tq, tk)

    m_prev = m_sc[...]
    m_new = jnp.maximum(m_prev, jnp.max(s, axis=-1, keepdims=True))
    alpha = jnp.exp(m_prev - m_new)
    p = jnp.exp(s - m_new)
    l_sc[...] = alpha * l_sc[...] + jnp.sum(p, axis=-1, keepdims=True)
    acc_sc[...] = alpha * acc_sc[...] + jnp.dot(
        p.astype(jnp.bfloat16), v_ref[0, 0], preferred_element_type=jnp.float32)
    m_sc[...] = m_new

    @pl.when(kv == pl.num_programs(3) - 1)
    def _():
        o_ref[0, 0] = (acc_sc[...] * pl.reciprocal(l_sc[...], approx=True)
                       ).astype(o_ref.dtype)


# ----------------------------------------------------------------------------
# Pallas wrappers
# ----------------------------------------------------------------------------

def layernorm(x2d, gamma, beta):
    M, C = x2d.shape
    tm = _pick_tile(M, 512, 8)
    return pl.pallas_call(
        _layernorm_kernel,
        out_shape=jax.ShapeDtypeStruct((M, C), x2d.dtype),
        grid=(M // tm,),
        in_specs=[pl.BlockSpec((tm, C), lambda i: (i, 0)),
                  pl.BlockSpec((1, C), lambda i: (0, 0)),
                  pl.BlockSpec((1, C), lambda i: (0, 0))],
        out_specs=pl.BlockSpec((tm, C), lambda i: (i, 0)),
        compiler_params=_cparams("parallel"),
    )(x2d, gamma, beta)


def matmul(x2d, w, out_dtype=None):
    # Full weight kept resident (constant-index block); grid only over rows.
    # TODO(synk): mark the weight block pipeline_mode=pl.Buffered(1) to halve
    # its VMEM footprint once single-buffered constant blocks are exercised.
    M, K = x2d.shape
    N = w.shape[1]
    out_dtype = out_dtype or x2d.dtype
    tm = _pick_tile(M, 512, 8)
    return pl.pallas_call(
        _matmul_kernel,
        out_shape=jax.ShapeDtypeStruct((M, N), out_dtype),
        grid=(M // tm,),
        in_specs=[pl.BlockSpec((tm, K), lambda i: (i, 0)),
                  pl.BlockSpec((K, N), lambda i: (0, 0))],
        out_specs=pl.BlockSpec((tm, N), lambda i: (i, 0)),
        compiler_params=_cparams("parallel"),
    )(x2d, w)


def ln_matmul(x2d, gamma, beta, w, out_dtype=None):
    M, K = x2d.shape
    N = w.shape[1]
    out_dtype = out_dtype or x2d.dtype
    tm = _pick_tile(M, 512, 8)
    return pl.pallas_call(
        _ln_matmul_kernel,
        out_shape=jax.ShapeDtypeStruct((M, N), out_dtype),
        grid=(M // tm,),
        in_specs=[pl.BlockSpec((tm, K), lambda i: (i, 0)),
                  pl.BlockSpec((1, K), lambda i: (0, 0)),
                  pl.BlockSpec((1, K), lambda i: (0, 0)),
                  pl.BlockSpec((K, N), lambda i: (0, 0))],
        out_specs=pl.BlockSpec((tm, N), lambda i: (i, 0)),
        compiler_params=_cparams("parallel"),
    )(x2d, gamma, beta, w)


def out_proj_residual(x2d, w, b, res2d, scale):
    M, K = x2d.shape
    N = w.shape[1]
    tm = _pick_tile(M, 512, 8)
    kern = functools.partial(_out_proj_residual_kernel, scale=float(scale))
    return pl.pallas_call(
        kern,
        out_shape=jax.ShapeDtypeStruct((M, N), res2d.dtype),
        grid=(M // tm,),
        in_specs=[pl.BlockSpec((tm, K), lambda i: (i, 0)),
                  pl.BlockSpec((K, N), lambda i: (0, 0)),
                  pl.BlockSpec((1, N), lambda i: (0, 0)),
                  pl.BlockSpec((tm, N), lambda i: (i, 0))],
        out_specs=pl.BlockSpec((tm, N), lambda i: (i, 0)),
        compiler_params=_cparams("parallel"),
    )(x2d, w, b, res2d)


def ln_geglu_ff(x2d, gamma, beta, w_hid, b_hid, w_gate, b_gate, w2, b2):
    M, C = x2d.shape
    DF = w_hid.shape[1]
    tm = _pick_tile(M, 256, 8)
    tdf = _pick_tile(DF, 512, 128)
    return pl.pallas_call(
        _ln_geglu_ff_kernel,
        out_shape=jax.ShapeDtypeStruct((M, C), x2d.dtype),
        grid=(M // tm, DF // tdf),
        in_specs=[pl.BlockSpec((tm, C), lambda i, j: (i, 0)),
                  pl.BlockSpec((1, C), lambda i, j: (0, 0)),
                  pl.BlockSpec((1, C), lambda i, j: (0, 0)),
                  pl.BlockSpec((C, tdf), lambda i, j: (0, j)),
                  pl.BlockSpec((1, tdf), lambda i, j: (0, j)),
                  pl.BlockSpec((C, tdf), lambda i, j: (0, j)),
                  pl.BlockSpec((1, tdf), lambda i, j: (0, j)),
                  pl.BlockSpec((tdf, C), lambda i, j: (j, 0)),
                  pl.BlockSpec((1, C), lambda i, j: (0, 0))],
        out_specs=pl.BlockSpec((tm, C), lambda i, j: (i, 0)),
        scratch_shapes=[pltpu.VMEM((tm, C), jnp.bfloat16),
                        pltpu.VMEM((tm, C), jnp.float32)],
        compiler_params=_cparams("parallel", "arbitrary"),
    )(x2d, gamma, beta, w_hid, b_hid, w_gate, b_gate, w2, b2)


def flash_mha(q, k, v, *, kv_repeat=1):
    """q: (Bq, H, Lq, dh); k/v: (Bk, H, Lk, dh) with Bq == Bk * kv_repeat.
    kv_repeat > 1 broadcasts each K/V batch to kv_repeat consecutive Q batches
    via the index_map (no materialized repeat). The softmax scale is folded
    into the q-projection weights, so none is applied here."""
    Bq, H, Lq, dh = q.shape
    Bk, _, Lk, _ = k.shape
    assert Bq == Bk * kv_repeat, (Bq, Bk, kv_repeat)
    tq = _pick_tile(Lq, 256, 8)
    tk = _pick_tile(Lk, 512, 8)
    kv_b = (lambda b: b) if kv_repeat == 1 else (lambda b: b // kv_repeat)
    # TODO(synk): batch 2-4 heads per grid step (block (1,Hb,tq,dh)) so the
    # output block is >=128 lanes wide (unmasked stores, fewer grid steps).
    return pl.pallas_call(
        _flash_attn_kernel,
        out_shape=jax.ShapeDtypeStruct((Bq, H, Lq, dh), q.dtype),
        grid=(Bq, H, Lq // tq, Lk // tk),
        in_specs=[
            pl.BlockSpec((1, 1, tq, dh), lambda b, h, qi, ki: (b, h, qi, 0)),
            pl.BlockSpec((1, 1, tk, dh), lambda b, h, qi, ki: (kv_b(b), h, ki, 0)),
            pl.BlockSpec((1, 1, tk, dh), lambda b, h, qi, ki: (kv_b(b), h, ki, 0)),
        ],
        out_specs=pl.BlockSpec((1, 1, tq, dh), lambda b, h, qi, ki: (b, h, qi, 0)),
        scratch_shapes=[pltpu.VMEM((tq, 1), jnp.float32),
                        pltpu.VMEM((tq, 1), jnp.float32),
                        pltpu.VMEM((tq, dh), jnp.float32)],
        compiler_params=_cparams("parallel", "parallel", "parallel", "arbitrary"),
    )(q, k, v)


# ----------------------------------------------------------------------------
# head packing helpers (XLA side)
# ----------------------------------------------------------------------------
# TODO(synk): these full-tensor relayouts could be removed entirely by having
# flash_mha index heads directly from the packed 2-D projection output; kept
# for now because the per-head (tq, dh) blocks of the 4-D layout satisfy the
# (8,128)/full-dim BlockSpec rule unconditionally.

def _heads_split(x2d, B, L, heads):
    # (B*L, inner) -> (B, heads, L, dh)
    inner = x2d.shape[-1]
    dh = inner // heads
    return x2d.reshape(B, L, heads, dh).transpose(0, 2, 1, 3)


def _heads_merge(x4d):
    # (B, heads, L, dh) -> (B*L, inner)
    B, H, L, dh = x4d.shape
    return x4d.transpose(0, 2, 1, 3).reshape(B * L, H * dh)


# ----------------------------------------------------------------------------
# Basic2p5DTransformerBlock forward
# ----------------------------------------------------------------------------

def basic_2p5d_transformer_block_forward(hidden_states,
                                         encoder_hidden_states,
                                         params,
                                         *,
                                         heads,
                                         num_in_batch=1,
                                         mode="wr",
                                         mva_scale=1.0,
                                         ref_scale=1.0,
                                         condition_embed_dict=None,
                                         layer_name="layer0",
                                         use_ma=True,
                                         use_ra=True):
    BN, L, C = hidden_states.shape
    assert BN % num_in_batch == 0, (BN, num_in_batch)
    B = BN // num_in_batch
    p = params
    h2d = hidden_states.reshape(-1, C)

    # ---- norm1 (materialized once: reused by attn1 / 'w' stash / refview / multiview) ----
    norm_h2d = layernorm(h2d, p["ln1_g"], p["ln1_b"])

    # ---- attn1: self-attention (fused QKV proj -> bf16, flash attn, fused out-proj + residual) ----
    a1 = p["attn1"]
    qkv = matmul(norm_h2d, a1["w_qkv"], out_dtype=jnp.bfloat16)
    inner = qkv.shape[-1] // 3
    q4 = _heads_split(qkv[:, :inner], BN, L, heads)
    k4 = _heads_split(qkv[:, inner:2 * inner], BN, L, heads)
    v4 = _heads_split(qkv[:, 2 * inner:], BN, L, heads)
    o2d = _heads_merge(flash_mha(q4, k4, v4))
    h2d = out_proj_residual(o2d, a1["wo"], a1["bo"], h2d, 1.0)

    # ---- 'w': stash norm_hidden_states as this layer's condition embedding ----
    if "w" in mode:
        condition_embed_dict[layer_name] = norm_h2d.reshape(B, num_in_batch * L, C)

    # ---- 'r': reference-view cross attention ----
    if "r" in mode and use_ra:
        ar = p["attn_refview"]
        cond = condition_embed_dict[layer_name]                   # (B, Lc, C)
        Lc = cond.shape[1]
        inner_r = ar["w_q"].shape[1]
        q4 = _heads_split(matmul(norm_h2d, ar["w_q"], out_dtype=jnp.bfloat16),
                          BN, L, heads)
        kv2d = matmul(cond.reshape(-1, C), ar["w_kv"], out_dtype=jnp.bfloat16)
        k4 = _heads_split(kv2d[:, :inner_r], B, Lc, heads)
        v4 = _heads_split(kv2d[:, inner_r:], B, Lc, heads)
        # per-view repeat of `cond` handled by the K/V index_map (b // num_in_batch)
        o2d = _heads_merge(flash_mha(q4, k4, v4, kv_repeat=num_in_batch))
        # TODO(synk): tensor-valued (per-sample) ref_scale not supported; float only.
        h2d = out_proj_residual(o2d, ar["wo"], ar["bo"], h2d, ref_scale)

    # ---- multiview self-attention over the (num_in_batch * L) token axis ----
    if num_in_batch > 1 and use_ma:
        am = p["attn_multiview"]
        Lmv = num_in_batch * L                 # (b n) l rows == b (n l) rows
        qkv = matmul(norm_h2d, am["w_qkv"], out_dtype=jnp.bfloat16)
        inner_m = qkv.shape[-1] // 3
        q4 = _heads_split(qkv[:, :inner_m], B, Lmv, heads)
        k4 = _heads_split(qkv[:, inner_m:2 * inner_m], B, Lmv, heads)
        v4 = _heads_split(qkv[:, 2 * inner_m:], B, Lmv, heads)
        o2d = _heads_merge(flash_mha(q4, k4, v4))
        h2d = out_proj_residual(o2d, am["wo"], am["bo"], h2d, mva_scale)

    # ---- attn2: cross attention to encoder_hidden_states (norm2 fused into q-proj) ----
    a2 = p["attn2"]
    Be, Le, Ce = encoder_hidden_states.shape
    inner_c = a2["w_q"].shape[1]
    q4 = _heads_split(ln_matmul(h2d, p["ln2_g"], p["ln2_b"], a2["w_q"],
                                out_dtype=jnp.bfloat16), BN, L, heads)
    kv2d = matmul(encoder_hidden_states.reshape(-1, Ce), a2["w_kv"],
                  out_dtype=jnp.bfloat16)
    k4 = _heads_split(kv2d[:, :inner_c], Be, Le, heads)
    v4 = _heads_split(kv2d[:, inner_c:], Be, Le, heads)
    o2d = _heads_merge(flash_mha(q4, k4, v4))
    h2d = out_proj_residual(o2d, a2["wo"], a2["bo"], h2d, 1.0)

    # ---- norm3 + GEGLU feed-forward + residual (DF-tiled accumulating kernel) ----
    h2d = ln_geglu_ff(h2d, p["ln3_g"], p["ln3_b"],
                      p["ff_w_hid"], p["ff_b_hid"],
                      p["ff_w_gate"], p["ff_b_gate"],
                      p["ff_w2"], p["ff_b2"])
    return h2d.reshape(BN, L, C)


# ----------------------------------------------------------------------------
# deterministic parameter construction
# ----------------------------------------------------------------------------

def _make_attn_params(key, q_dim, kv_dim, inner_dim, *, fused_qkv, q_scale):
    ks = jax.random.split(key, 5)
    s = 0.05
    # 1/sqrt(dh) softmax scale folded into the q-projection weight (linear op).
    wq = (s * q_scale) * jax.random.normal(ks[0], (q_dim, inner_dim), jnp.float32)
    wk = s * jax.random.normal(ks[1], (kv_dim, inner_dim), jnp.float32)
    wv = s * jax.random.normal(ks[2], (kv_dim, inner_dim), jnp.float32)
    wo = s * jax.random.normal(ks[3], (inner_dim, q_dim), jnp.float32)
    bo = s * jax.random.normal(ks[4], (1, q_dim), jnp.float32)
    p = {"wo": wo.astype(jnp.bfloat16), "bo": bo}
    if fused_qkv:
        p["w_qkv"] = jnp.concatenate([wq, wk, wv], axis=1).astype(jnp.bfloat16)
    else:
        p["w_q"] = wq.astype(jnp.bfloat16)
        p["w_kv"] = jnp.concatenate([wk, wv], axis=1).astype(jnp.bfloat16)
    return p


def make_params(key, dim, cross_dim, heads, dim_head):
    inner = heads * dim_head
    df = 4 * dim
    q_scale = 1.0 / math.sqrt(dim_head)
    keys = jax.random.split(key, 16)
    s = 0.05
    return {
        "ln1_g": 1.0 + 0.1 * jax.random.normal(keys[0], (1, dim), jnp.float32),
        "ln1_b": 0.1 * jax.random.normal(keys[1], (1, dim), jnp.float32),
        "ln2_g": 1.0 + 0.1 * jax.random.normal(keys[2], (1, dim), jnp.float32),
        "ln2_b": 0.1 * jax.random.normal(keys[3], (1, dim), jnp.float32),
        "ln3_g": 1.0 + 0.1 * jax.random.normal(keys[4], (1, dim), jnp.float32),
        "ln3_b": 0.1 * jax.random.normal(keys[5], (1, dim), jnp.float32),
        "attn1": _make_attn_params(keys[6], dim, dim, inner,
                                   fused_qkv=True, q_scale=q_scale),
        "attn_refview": _make_attn_params(keys[7], dim, dim, inner,
                                          fused_qkv=False, q_scale=q_scale),
        "attn_multiview": _make_attn_params(keys[8], dim, dim, inner,
                                            fused_qkv=True, q_scale=q_scale),
        "attn2": _make_attn_params(keys[9], dim, cross_dim, inner,
                                   fused_qkv=False, q_scale=q_scale),
        # FeedForward: GEGLU(dim -> 4*dim, gate 4*dim) then Linear(4*dim -> dim)
        "ff_w_hid": (s * jax.random.normal(keys[10], (dim, df), jnp.float32)).astype(jnp.bfloat16),
        "ff_b_hid": s * jax.random.normal(keys[11], (1, df), jnp.float32),
        "ff_w_gate": (s * jax.random.normal(keys[12], (dim, df), jnp.float32)).astype(jnp.bfloat16),
        "ff_b_gate": s * jax.random.normal(keys[13], (1, df), jnp.float32),
        "ff_w2": (s * jax.random.normal(keys[14], (df, dim), jnp.float32)).astype(jnp.bfloat16),
        "ff_b2": s * jax.random.normal(keys[15], (1, dim), jnp.float32),
    }


# ----------------------------------------------------------------------------
# main
# ----------------------------------------------------------------------------

if __name__ == "__main__":
    B = 2               # "true" batch
    N = 2               # num_in_batch (views)
    L = 16              # tokens per view
    C = 32              # dim
    heads = 4
    dim_head = C // heads
    cross_dim = 48      # encoder hidden size
    L_enc = 8

    key = jax.random.PRNGKey(0)
    k_h, k_e, k_p = jax.random.split(key, 3)
    hidden_states = jax.random.normal(k_h, (B * N, L, C), jnp.float32)
    encoder_hidden_states = jax.random.normal(k_e, (B * N, L_enc, cross_dim), jnp.float32)
    params = make_params(k_p, C, cross_dim, heads, dim_head)

    condition_embed_dict = {}   # host-side dict as in the PyTorch module
    # TODO(synk): torch.nn.Dropout paths are identity in eval mode and are omitted.
    out = basic_2p5d_transformer_block_forward(
        hidden_states,
        encoder_hidden_states,
        params,
        heads=heads,
        num_in_batch=N,
        mode="wr",
        mva_scale=0.7,
        ref_scale=0.5,
        condition_embed_dict=condition_embed_dict,
        layer_name="down_blocks.0.attn0",
        use_ma=True,
        use_ra=True,
    )
    out = jax.block_until_ready(out)
    assert out.shape == (B * N, L, C)
    assert bool(jnp.all(jnp.isfinite(out)))
    print("KERNEL_OK")
</pallas_src>

<mosaic_0001>
module attributes {stable_mosaic.version = 11 : i64} {
  func.func @_layernorm_kernel(%arg0: i32, %arg1: memref<64x32xf32, #tpu.memory_space<vmem>>, %arg2: memref<1x32xf32, #tpu.memory_space<vmem>>, %arg3: memref<1x32xf32, #tpu.memory_space<vmem>>, %arg4: memref<64x32xf32, #tpu.memory_space<vmem>>) attributes {dimension_semantics = [#tpu.dimension_semantics<parallel>], iteration_bounds = array<i64: 1>, scalar_prefetch = 0 : i64, scratch_operands = 0 : i64, tpu.core_type = #tpu.core_type<tc>, window_params = [{transform_indices = @transform_0, window_bounds = array<i64: 64, 32>}, {pipeline_mode = #tpu.pipeline_mode<synchronous>, transform_indices = @transform_1, window_bounds = array<i64: 1, 32>}, {pipeline_mode = #tpu.pipeline_mode<synchronous>, transform_indices = @transform_2, window_bounds = array<i64: 1, 32>}, {transform_indices = @transform_3, window_bounds = array<i64: 64, 32>}]} {
    %c0 = arith.constant 0 : index
    %c0_0 = arith.constant 0 : index
    %0 = vector.load %arg1[%c0, %c0_0] : memref<64x32xf32, #tpu.memory_space<vmem>>, vector<64x32xf32>
    %cst = arith.constant dense<0.000000e+00> : vector<64xf32>
    %1 = vector.multi_reduction <add>, %0, %cst [1] : vector<64x32xf32> to vector<64xf32>
    %2 = vector.shape_cast %1 : vector<64xf32> to vector<64x1xf32>
    %cst_1 = arith.constant 3.200000e+01 : f32
    %3 = vector.broadcast %cst_1 : f32 to vector<64x1xf32>
    %4 = arith.divf %2, %3 : vector<64x1xf32>
    %5 = vector.broadcast %4 : vector<64x1xf32> to vector<64x32xf32>
    %6 = arith.subf %0, %5 : vector<64x32xf32>
    %7 = arith.mulf %6, %6 : vector<64x32xf32>
    %cst_2 = arith.constant dense<0.000000e+00> : vector<64xf32>
    %8 = vector.multi_reduction <add>, %7, %cst_2 [1] : vector<64x32xf32> to vector<64xf32>
    %9 = vector.shape_cast %8 : vector<64xf32> to vector<64x1xf32>
    %cst_3 = arith.constant 3.200000e+01 : f32
    %10 = vector.broadcast %cst_3 : f32 to vector<64x1xf32>
    %11 = arith.divf %9, %10 : vector<64x1xf32>
    %12 = vector.broadcast %4 : vector<64x1xf32> to vector<64x32xf32>
    %13 = arith.subf %0, %12 : vector<64x32xf32>
    %cst_4 = arith.constant 9.99999974E-6 : f32
    %14 = vector.broadcast %cst_4 : f32 to vector<64x1xf32>
    %15 = arith.addf %11, %14 : vector<64x1xf32>
    %16 = math.rsqrt %15 : vector<64x1xf32>
    %17 = vector.broadcast %16 : vector<64x1xf32> to vector<64x32xf32>
    %18 = arith.mulf %13, %17 : vector<64x32xf32>
    %c0_5 = arith.constant 0 : index
    %c0_6 = arith.constant 0 : index
    %19 = vector.load %arg2[%c0_5, %c0_6] : memref<1x32xf32, #tpu.memory_space<vmem>>, vector<1x32xf32>
    %20 = vector.broadcast %19 : vector<1x32xf32> to vector<64x32xf32>
    %21 = arith.mulf %18, %20 : vector<64x32xf32>
    %c0_7 = arith.constant 0 : index
    %c0_8 = arith.constant 0 : index
    %22 = vector.load %arg3[%c0_7, %c0_8] : memref<1x32xf32, #tpu.memory_space<vmem>>, vector<1x32xf32>
    %23 = vector.broadcast %22 : vector<1x32xf32> to vector<64x32xf32>
    %24 = arith.addf %21, %23 : vector<64x32xf32>
    %c0_9 = arith.constant 0 : index
    %c0_10 = arith.constant 0 : index
    %25 = vector.load %arg4[%c0_9, %c0_10] : memref<64x32xf32, #tpu.memory_space<vmem>>, vector<64x32xf32>
    tpu.vector_store %arg4[%c0_9, %c0_10], %24 {strides = array<i32>} : memref<64x32xf32, #tpu.memory_space<vmem>>, vector<64x32xf32>,
    return
  }
  func.func @transform_0(%arg0: i32) -> (i32, i32) {
    %c0_i32 = arith.constant 0 : i32
    %c0_i32_0 = arith.constant 0 : i32
    return %arg0, %c0_i32 : i32, i32
  }
  func.func @transform_1(%arg0: i32) -> (i32, i32) {
    %c0_i32 = arith.constant 0 : i32
    %c0_i32_0 = arith.constant 0 : i32
    %c0_i32_1 = arith.constant 0 : i32
    return %c0_i32, %c0_i32_0 : i32, i32
  }
  func.func @transform_2(%arg0: i32) -> (i32, i32) {
    %c0_i32 = arith.constant 0 : i32
    %c0_i32_0 = arith.constant 0 : i32
    %c0_i32_1 = arith.constant 0 : i32
    return %c0_i32, %c0_i32_0 : i32, i32
  }
  func.func @transform_3(%arg0: i32) -> (i32, i32) {
    %c0_i32 = arith.constant 0 : i32
    %c0_i32_0 = arith.constant 0 : i32
    return %arg0, %c0_i32 : i32, i32
  }
}

</mosaic_0001>

<llo_original>
// kernel: tpu_custom_call.1
$region0: #{tpu_custom_call.1}
  #allocation0 [shape = 'u32[]', space=smem, size = 0x4, offset = 0x4, fixed_abs, tag = 'smem constant byte address 0x4 - core index']
  #allocation1 [shape = 'u32[72,128]{1,0:T(1,128)}', space=vmem, size = 0x9000, scoped, tag = 'internal scratch']
  %s0 = inlined_call_operand.vmem [shape: f32[64,32], index: 0, kind: input, shape index: {}]
  %s1 = inlined_call_operand.vmem [shape: f32[1,32], index: 1, kind: input, shape index: {}]
  %s2 = inlined_call_operand.vmem [shape: f32[1,32], index: 2, kind: input, shape index: {}]
  %s3 = inlined_call_operand.vmem [shape: f32[64,32], index: 3, kind: output, shape index: {}]
  %s4 = sld [smem:[#allocation0]]
  $region22: #{tpu_custom_call.1} parent=0
    _
  %s6 = ssub.s32 1, %s4
  %s7 = scalar_select 0, %s6, %s4
  // Predicated region
  $region2: #{tpu_custom_call.1} parent=0 // pred_check
    _
  $region3: #{tpu_custom_call.1} parent=0 // pred_check_branch
    %9 = sbr.rel (0) target = $region5
  $region4: #{tpu_custom_call.1} parent=0 // pred_region
    _
  $region5: #{tpu_custom_call.1} parent=0 // pred_fallthru
    _
  // Predicated region
  $region6: #{tpu_custom_call.1} parent=0 // pred_check
    _
  $region7: #{tpu_custom_call.1} parent=0 // pred_check_branch
    %11 = sbr.rel (0) target = $region9
  $region8: #{tpu_custom_call.1} parent=0 // pred_region
    _
  $region9: #{tpu_custom_call.1} parent=0 // pred_fallthru
    _
  // Predicated region
  $region10: #{tpu_custom_call.1} parent=0 // pred_check
    _
  $region11: #{tpu_custom_call.1} parent=0 // pred_check_branch
    %13 = sbr.rel (0) target = $region13
  $region12: #{tpu_custom_call.1} parent=0 // pred_region
    _
  $region13: #{tpu_custom_call.1} parent=0 // pred_fallthru
    _
  %v14 = vld [vmem:[%s0] sm:$0xff]
  %v15 = vld [vmem:[%s0 + $0x8] sm:$0xff]
  %v16 = vld [vmem:[%s0 + $0x10] sm:$0xff]
  %v17 = vld [vmem:[%s0 + $0x18] sm:$0xff]
  %v18 = vld [vmem:[%s0 + $0x20] sm:$0xff]
  %v19 = vld [vmem:[%s0 + $0x28] sm:$0xff]
  %v20 = vld [vmem:[%s0 + $0x30] sm:$0xff]
  %v21 = vld [vmem:[%s0 + $0x38] sm:$0xff]
  %vm22 = vcmask 261120
  %v23 = vsel %vm22, %v14, 0.0
  %24 = vadd.xlane.f32.xlu0 %v23
  %v25 = vpop.xlane.xlu0 %24
  %v26 = vsel %vm22, %v15, 0.0
  %27 = vadd.xlane.f32.xlu0 %v26
  %v28 = vpop.xlane.xlu0 %27
  %v29 = vsel %vm22, %v16, 0.0
  %30 = vadd.xlane.f32.xlu0 %v29
  %v31 = vpop.xlane.xlu0 %30
  %v32 = vsel %vm22, %v17, 0.0
  %33 = vadd.xlane.f32.xlu0 %v32
  %v34 = vpop.xlane.xlu0 %33
  %v35 = vsel %vm22, %v18, 0.0
  %36 = vadd.xlane.f32.xlu0 %v35
  %v37 = vpop.xlane.xlu0 %36
  %v38 = vsel %vm22, %v19, 0.0
  %39 = vadd.xlane.f32.xlu0 %v38
  %v40 = vpop.xlane.xlu0 %39
  %v41 = vsel %vm22, %v20, 0.0
  %42 = vadd.xlane.f32.xlu0 %v41
  %v43 = vpop.xlane.xlu0 %42
  %v44 = vsel %vm22, %v21, 0.0
  %45 = vadd.xlane.f32.xlu0 %v44
  %v46 = vpop.xlane.xlu0 %45
  %v47 = vrcp.pop 32.0
  %v48 = vmul.f32 32.0, %v47
  %v49 = vsub.f32 1.0, %v48
  %v50 = vmul.f32 %v47, %v49
  %v51 = vadd.f32 %v47, %v50
  %vm52 = vweird.f32 %v47
  %v53 = vsel %vm52, %v47, %v51
  %v54 = vmul.f32 %v25, %v53
  %v55 = vmul.f32 %v28, %v53
  %v56 = vmul.f32 %v31, %v53
  %v57 = vmul.f32 %v34, %v53
  %v58 = vmul.f32 %v37, %v53
  %v59 = vmul.f32 %v40, %v53
  %v60 = vmul.f32 %v43, %v53
  %v61 = vmul.f32 %v46, %v53
  %v62 = vsub.f32 %v14, %v54
  %v63 = vsub.f32 %v15, %v55
  %v64 = vsub.f32 %v16, %v56
  %v65 = vsub.f32 %v17, %v57
  %v66 = vsub.f32 %v18, %v58
  %v67 = vsub.f32 %v19, %v59
  %v68 = vsub.f32 %v20, %v60
  %v69 = vsub.f32 %v21, %v61
  %v70 = vmul.f32 %v62, %v62
  %v71 = vmul.f32 %v63, %v63
  %v72 = vmul.f32 %v64, %v64
  %v73 = vmul.f32 %v65, %v65
  %v74 = vmul.f32 %v66, %v66
  %v75 = vmul.f32 %v67, %v67
  %v76 = vmul.f32 %v68, %v68
  %v77 = vmul.f32 %v69, %v69
  %v78 = vsel %vm22, %v70, 0.0
  %79 = vadd.xlane.f32.xlu0 %v78
  %v80 = vpop.xlane.xlu0 %79
  %v81 = vsel %vm22, %v71, 0.0
  %82 = vadd.xlane.f32.xlu0 %v81
  %v83 = vpop.xlane.xlu0 %82
  %v84 = vsel %vm22, %v72, 0.0
  %85 = vadd.xlane.f32.xlu0 %v84
  %v86 = vpop.xlane.xlu0 %85
  %v87 = vsel %vm22, %v73, 0.0
  %88 = vadd.xlane.f32.xlu0 %v87
  %v89 = vpop.xlane.xlu0 %88
  %v90 = vsel %vm22, %v74, 0.0
  %91 = vadd.xlane.f32.xlu0 %v90
  %v92 = vpop.xlane.xlu0 %91
  %v93 = vsel %vm22, %v75, 0.0
  %94 = vadd.xlane.f32.xlu0 %v93
  %v95 = vpop.xlane.xlu0 %94
  %v96 = vsel %vm22, %v76, 0.0
  %97 = vadd.xlane.f32.xlu0 %v96
  %v98 = vpop.xlane.xlu0 %97
  %v99 = vsel %vm22, %v77, 0.0
  %100 = vadd.xlane.f32.xlu0 %v99
  %v101 = vpop.xlane.xlu0 %100
  %v102 = vmul.f32 %v80, %v53
  %v103 = vmul.f32 %v83, %v53
  %v104 = vmul.f32 %v86, %v53
  %v105 = vmul.f32 %v89, %v53
  %v106 = vmul.f32 %v92, %v53
  %v107 = vmul.f32 %v95, %v53
  %v108 = vmul.f32 %v98, %v53
  %v109 = vmul.f32 %v101, %v53
  %v110 = vadd.f32 %v102, 1e-05
  %v111 = vadd.f32 %v103, 1e-05
  %v112 = vadd.f32 %v104, 1e-05
  %v113 = vadd.f32 %v105, 1e-05
  %v114 = vadd.f32 %v106, 1e-05
  %v115 = vadd.f32 %v107, 1e-05
  %v116 = vadd.f32 %v108, 1e-05
  %v117 = vadd.f32 %v109, 1e-05
  %v118 = vrsqrt.pop %v110
  %v119 = vmul.f32 %v118, %v110
  %v120 = vmul.f32 %v119, %v118
  %v121 = vmul.f32 0.5, %v120
  %v122 = vsub.f32 1.5, %v121
  %v123 = vmul.f32 %v118, %v122
  %vm124 = vweird.f32 %v110
  %vm125 = vweird.f32 %v118
  %vm126 = vmor %vm124, %vm125
  %v127 = vsel %vm126, %v118, %v123
  %v128 = vrsqrt.pop %v111
  %v129 = vmul.f32 %v128, %v111
  %v130 = vmul.f32 %v129, %v128
  %v131 = vmul.f32 0.5, %v130
  %v132 = vsub.f32 1.5, %v131
  %v133 = vmul.f32 %v128, %v132
  %vm134 = vweird.f32 %v111
  %vm135 = vweird.f32 %v128
  %vm136 = vmor %vm134, %vm135
  %v137 = vsel %vm136, %v128, %v133
  %v138 = vrsqrt.pop %v112
  %v139 = vmul.f32 %v138, %v112
  %v140 = vmul.f32 %v139, %v138
  %v141 = vmul.f32 0.5, %v140
  %v142 = vsub.f32 1.5, %v141
  %v143 = vmul.f32 %v138, %v142
  %vm144 = vweird.f32 %v112
  %vm145 = vweird.f32 %v138
  %vm146 = vmor %vm144, %vm145
  %v147 = vsel %vm146, %v138, %v143
  %v148 = vrsqrt.pop %v113
  %v149 = vmul.f32 %v148, %v113
  %v150 = vmul.f32 %v149, %v148
  %v151 = vmul.f32 0.5, %v150
  %v152 = vsub.f32 1.5, %v151
  %v153 = vmul.f32 %v148, %v152
  %vm154 = vweird.f32 %v113
  %vm155 = vweird.f32 %v148
  %vm156 = vmor %vm154, %vm155
  %v157 = vsel %vm156, %v148, %v153
  %v158 = vrsqrt.pop %v114
  %v159 = vmul.f32 %v158, %v114
  %v160 = vmul.f32 %v159, %v158
  %v161 = vmul.f32 0.5, %v160
  %v162 = vsub.f32 1.5, %v161
  %v163 = vmul.f32 %v158, %v162
  %vm164 = vweird.f32 %v114
  %vm165 = vweird.f32 %v158
  %vm166 = vmor %vm164, %vm165
  %v167 = vsel %vm166, %v158, %v163
  %v168 = vrsqrt.pop %v115
  %v169 = vmul.f32 %v168, %v115
  %v170 = vmul.f32 %v169, %v168
  %v171 = vmul.f32 0.5, %v170
  %v172 = vsub.f32 1.5, %v171
  %v173 = vmul.f32 %v168, %v172
  %vm174 = vweird.f32 %v115
  %vm175 = vweird.f32 %v168
  %vm176 = vmor %vm174, %vm175
  %v177 = vsel %vm176, %v168, %v173
  %v178 = vrsqrt.pop %v116
  %v179 = vmul.f32 %v178, %v116
  %v180 = vmul.f32 %v179, %v178
  %v181 = vmul.f32 0.5, %v180
  %v182 = vsub.f32 1.5, %v181
  %v183 = vmul.f32 %v178, %v182
  %vm184 = vweird.f32 %v116
  %vm185 = vweird.f32 %v178
  %vm186 = vmor %vm184, %vm185
  %v187 = vsel %vm186, %v178, %v183
  %v188 = vrsqrt.pop %v117
  %v189 = vmul.f32 %v188, %v117
  %v190 = vmul.f32 %v189, %v188
  %v191 = vmul.f32 0.5, %v190
  %v192 = vsub.f32 1.5, %v191
  %v193 = vmul.f32 %v188, %v192
  %vm194 = vweird.f32 %v117
  %vm195 = vweird.f32 %v188
  %vm196 = vmor %vm194, %vm195
  %v197 = vsel %vm196, %v188, %v193
  %v198 = vmul.f32 %v62, %v127
  %v199 = vmul.f32 %v63, %v137
  %v200 = vmul.f32 %v64, %v147
  %v201 = vmul.f32 %v65, %v157
  %v202 = vmul.f32 %v66, %v167
  %v203 = vmul.f32 %v67, %v177
  %v204 = vmul.f32 %v68, %v187
  %v205 = vmul.f32 %v69, %v197
  %v206 = vld [vmem:[%s1] sm:$0x1]
  %v208 = vperm.slane %v206, 0
  %v210 = vmul.f32 %v198, %v208
  %v211 = vmul.f32 %v199, %v208
  %v212 = vmul.f32 %v200, %v208
  %v213 = vmul.f32 %v201, %v208
  %v214 = vmul.f32 %v202, %v208
  %v215 = vmul.f32 %v203, %v208
  %v216 = vmul.f32 %v204, %v208
  %v217 = vmul.f32 %v205, %v208
  %v218 = vld [vmem:[%s2] sm:$0x1]
  %v220 = vperm.slane %v218, 0
  %v222 = vadd.f32 %v210, %v220
  %v223 = vadd.f32 %v211, %v220
  %v224 = vadd.f32 %v212, %v220
  %v225 = vadd.f32 %v213, %v220
  %v226 = vadd.f32 %v214, %v220
  %v227 = vadd.f32 %v215, %v220
  %v228 = vadd.f32 %v216, %v220
  %v229 = vadd.f32 %v217, %v220
  %230 = vst.msk [vmem:[%s3] sm:$0xff] %vm22, %v222
  %231 = vst.msk [vmem:[%s3 + $0x8] sm:$0xff] %vm22, %v223
  %232 = vst.msk [vmem:[%s3 + $0x10] sm:$0xff] %vm22, %v224
  %233 = vst.msk [vmem:[%s3 + $0x18] sm:$0xff] %vm22, %v225
  %234 = vst.msk [vmem:[%s3 + $0x20] sm:$0xff] %vm22, %v226
  %235 = vst.msk [vmem:[%s3 + $0x28] sm:$0xff] %vm22, %v227
  %236 = vst.msk [vmem:[%s3 + $0x30] sm:$0xff] %vm22, %v228
  %237 = vst.msk [vmem:[%s3 + $0x38] sm:$0xff] %vm22, %v229
  // Predicated region
  $region14: #{tpu_custom_call.1} parent=0 // pred_check
    _
  $region15: #{tpu_custom_call.1} parent=0 // pred_check_branch
    %239 = sbr.rel (0) target = $region17
  $region16: #{tpu_custom_call.1} parent=0 // pred_region
    _
  $region17: #{tpu_custom_call.1} parent=0 // pred_fallthru
    _
  // Predicated region
  $region18: #{tpu_custom_call.1} parent=0 // pred_check
    _
  $region19: #{tpu_custom_call.1} parent=0 // pred_check_branch
    %241 = sbr.rel (0) target = $region21
  $region20: #{tpu_custom_call.1} parent=0 // pred_region
    _
  $region21: #{tpu_custom_call.1} parent=0 // pred_fallthru
    _

</llo_original>
